<compile_context>
chip_gen: v5e
topology: v5e:2x2
jax: 0.10.0
libtpu: 0.0.40
codegen_flags: <defaults>
</compile_context>

<pallas_src>
import functools
import math

import jax
import jax.numpy as jnp
from jax import lax
from jax.experimental import pallas as pl
from jax.experimental.pallas import tpu as pltpu

_VMEM = pl.BlockSpec(memory_space=pltpu.MemorySpace.VMEM)
_VMEM_LIMIT = 32 * 1024 * 1024   # safe on v5e/v6e/v7x; above v5e's 16 MiB default


# ----------------------------------------------------------------------------
# Fused per-layer kernel: QKVS projections + per-head attention (MXU matmuls)
# + edge-attr terms + skip + BatchNorm(eval) + ReLU.
# ----------------------------------------------------------------------------
def fused_layer_kernel(x_full_ref, x_tile_ref, mask_ref, e_ref,
                       wqs_ref, bqs_ref, wkv_ref, bkv_ref, we_ref,
                       gamma_ref, beta_ref, rmean_ref, rvar_ref,
                       o_ref, acc_ref, *, heads, head_dim, eps):
    f32 = jnp.float32
    HC = heads * head_dim
    scale = 1.0 / math.sqrt(head_dim)

    x_all = x_full_ref[...]                      # [N,  Fin] (all src nodes)
    x_t = x_tile_ref[...]                        # [T,  Fin] (dst-tile rows)

    # Fused lane-dense projections (single MXU matmul each).
    proj_qs = jnp.dot(x_t, wqs_ref[...], preferred_element_type=f32) + bqs_ref[...]
    proj_kv = jnp.dot(x_all, wkv_ref[...], preferred_element_type=f32) + bkv_ref[...]
    q = proj_qs[:, :HC]                          # [T, HC]
    skip = proj_qs[:, HC:]                       # [T, HC]  (lin_skip)
    k = proj_kv[:, :HC]                          # [N, HC]
    v = proj_kv[:, HC:]                          # [N, HC]

    e3 = e_ref[...]                              # [T, N, edge_dim] raw edge attrs
    maskb = mask_ref[...] > 0.0                  # single compare, reused

    cdim = (((1,), (1,)), ((), ()))              # contract last dims, no batch

    for h in range(heads):                       # heads is small & static
        lo = h * head_dim
        q_h = q[:, lo:lo + head_dim]             # [T, C]
        k_h = k[:, lo:lo + head_dim]             # [N, C]
        v_h = v[:, lo:lo + head_dim]             # [N, C]
        we_h = we_ref[:, lo:lo + head_dim]       # [edge_dim, C]

        # score = (q · (k + We·e)) / sqrt(C)
        #       = q·kᵀ  +  e·(We·qᵀ)         -> both halves feed the MXU.
        u_h = lax.dot_general(q_h, we_h, cdim, preferred_element_type=f32)   # [T,E]
        s_qk = lax.dot_general(q_h, k_h, cdim, preferred_element_type=f32)   # [T,N]
        s_qe = jnp.sum(e3 * u_h[:, None, :], axis=-1)                        # [T,N]
        scores = (s_qk + s_qe) * scale
        scores = jnp.where(maskb, scores, -1e30)

        # masked segment softmax per destination node
        m = jnp.max(scores, axis=-1, keepdims=True)
        p = jnp.where(maskb, jnp.exp(scores - m), 0.0)
        denom = jnp.sum(p, axis=-1, keepdims=True)
        inv = pl.reciprocal(jnp.where(denom > 0.0, denom, 1.0), approx=True)
        alpha = p * inv                                                      # [T,N]

        # out = α·v  +  (Σ_n α·e)·We       -> both halves feed the MXU.
        a_e = jnp.sum(alpha[:, :, None] * e3, axis=1)                        # [T,E]
        out_h = (jnp.dot(alpha, v_h, preferred_element_type=f32)
                 + jnp.dot(a_e, we_h, preferred_element_type=f32))           # [T,C]
        acc_ref[:, lo:lo + head_dim] = out_h     # write head directly into scratch

    out = acc_ref[...] + skip                    # concat(heads) + lin_skip

    # BatchNorm1d (eval mode: running stats) + ReLU
    inv_std = lax.rsqrt(rvar_ref[...] + eps)
    out = (out - rmean_ref[...]) * inv_std * gamma_ref[...] + beta_ref[...]
    o_ref[...] = jnp.maximum(out, 0.0)


# ----------------------------------------------------------------------------
# global_mean_pool (one-hot matmul) + fc1 + ReLU + fc2.
# ----------------------------------------------------------------------------
def pool_mlp_kernel(onehot_ref, invcnt_ref, x_ref,
                    w1_ref, b1_ref, w2_ref, b2_ref, o_ref):
    pooled = (jnp.dot(onehot_ref[...], x_ref[...], preferred_element_type=jnp.float32)
              * invcnt_ref[...])                                             # [G, HC]
    hdn = jnp.maximum(jnp.dot(pooled, w1_ref[...],
                              preferred_element_type=jnp.float32) + b1_ref[...], 0.0)
    o_ref[...] = jnp.dot(hdn, w2_ref[...],
                         preferred_element_type=jnp.float32) + b2_ref[...]


# ----------------------------------------------------------------------------
# Wrappers
# ----------------------------------------------------------------------------
def transformer_conv_layer(x, adj_mask, edge_attr_dense, p, *,
                           heads, head_dim, tile_dst=None):
    N, fin = x.shape
    HC = heads * head_dim
    edge_dim = edge_attr_dense.shape[-1]
    T = N if tile_dst is None else min(tile_dst, N)
    assert N % T == 0, "dst tile must divide N (pad node count for real graphs)"

    kernel = functools.partial(fused_layer_kernel,
                               heads=heads, head_dim=head_dim, eps=1e-5)

    def whole(arr):
        nd = arr.ndim
        return pl.BlockSpec(arr.shape, lambda i, _nd=nd: (0,) * _nd)

    in_specs = [
        pl.BlockSpec((N, fin), lambda i: (0, 0)),               # x: all src rows
        pl.BlockSpec((T, fin), lambda i: (i, 0)),               # x: dst-tile rows
        pl.BlockSpec((T, N), lambda i: (i, 0)),                 # adjacency mask tile
        pl.BlockSpec((T, N, edge_dim), lambda i: (i, 0, 0)),    # raw edge attrs tile
        whole(p["w_qs"]), whole(p["b_qs"]),
        whole(p["w_kv"]), whole(p["b_kv"]),
        whole(p["we"]),
        whole(p["bn_gamma"]), whole(p["bn_beta"]),
        whole(p["bn_mean"]), whole(p["bn_var"]),
    ]
    return pl.pallas_call(
        kernel,
        out_shape=jax.ShapeDtypeStruct((N, HC), jnp.float32),
        grid_spec=pltpu.PrefetchScalarGridSpec(
            num_scalar_prefetch=0,
            grid=(N // T,),
            in_specs=in_specs,
            out_specs=pl.BlockSpec((T, HC), lambda i: (i, 0)),
            scratch_shapes=[pltpu.VMEM((T, HC), jnp.float32)],
        ),
        compiler_params=pltpu.CompilerParams(
            dimension_semantics=("parallel",),
            vmem_limit_bytes=_VMEM_LIMIT,
        ),
    )(x, x, adj_mask, edge_attr_dense,
      p["w_qs"], p["b_qs"], p["w_kv"], p["b_kv"], p["we"],
      p["bn_gamma"], p["bn_beta"], p["bn_mean"], p["bn_var"])


def pool_and_mlp(onehot, inv_counts, h, w1, b1, w2, b2):
    G = onehot.shape[0]
    out_dim = w2.shape[1]
    return pl.pallas_call(
        pool_mlp_kernel,
        out_shape=jax.ShapeDtypeStruct((G, out_dim), jnp.float32),
        in_specs=[_VMEM] * 7,
        out_specs=_VMEM,
        compiler_params=pltpu.CompilerParams(vmem_limit_bytes=_VMEM_LIMIT),
    )(onehot, inv_counts, h, w1, b1, w2, b2)


def solubility_forward(x, adj_mask, edge_attr_dense, onehot, inv_counts, params,
                       *, heads, hidden_channels, tile_dst=None):
    h = x
    for layer_p in params["layers"]:
        h = transformer_conv_layer(h, adj_mask, edge_attr_dense, layer_p,
                                   heads=heads, head_dim=hidden_channels,
                                   tile_dst=tile_dst)
    return pool_and_mlp(onehot, inv_counts, h,
                        params["fc1_w"], params["fc1_b"],
                        params["fc2_w"], params["fc2_b"])


# ----------------------------------------------------------------------------
# Deterministic parameter construction (weights fused lane-dense)
# ----------------------------------------------------------------------------
def make_layer_params(key, fin, heads, hidden, edge_dim):
    HC = heads * hidden
    ks = jax.random.split(key, 12)
    rnd = lambda k, shape, s=0.1: jax.random.normal(k, shape, jnp.float32) * s
    wq, bq = rnd(ks[0], (fin, HC)), rnd(ks[1], (1, HC))
    wk, bk = rnd(ks[2], (fin, HC)), rnd(ks[3], (1, HC))
    wv, bv = rnd(ks[4], (fin, HC)), rnd(ks[5], (1, HC))
    we = rnd(ks[6], (edge_dim, HC))                 # lin_edge has no bias in PyG
    wskip, bskip = rnd(ks[7], (fin, HC)), rnd(ks[8], (1, HC))
    return dict(
        w_qs=jnp.concatenate([wq, wskip], axis=1),   # [Fin, 2*HC]  (q | skip)
        b_qs=jnp.concatenate([bq, bskip], axis=1),
        w_kv=jnp.concatenate([wk, wv], axis=1),      # [Fin, 2*HC]  (k | v)
        b_kv=jnp.concatenate([bk, bv], axis=1),
        we=we,
        bn_gamma=1.0 + rnd(ks[9], (1, HC)),
        bn_beta=rnd(ks[10], (1, HC)),
        bn_mean=rnd(ks[11], (1, HC)),
        bn_var=jnp.ones((1, HC), jnp.float32),
    )


if __name__ == "__main__":
    # Model hyper-parameters
    in_channels, hidden_channels, out_channels = 4, 8, 1
    num_layers, heads, edge_dim = 2, 2, 4
    HC = hidden_channels * heads

    # Synthetic graph: 2 graphs of 4 nodes each, bidirectional ring per graph.
    N, G = 8, 2
    batch = jnp.array([0, 0, 0, 0, 1, 1, 1, 1], dtype=jnp.int32)
    edges = []
    for g in range(G):
        base = g * 4
        for a in range(4):
            b = (a + 1) % 4
            edges.append((base + a, base + b))
            edges.append((base + b, base + a))
    edge_index = jnp.array(edges, dtype=jnp.int32).T          # [2, E] (src, dst)
    E = edge_index.shape[1]

    key = jax.random.PRNGKey(0)
    k_x, k_ea, k_l0, k_l1, k_fc1, k_fc2 = jax.random.split(key, 6)
    x = jax.random.normal(k_x, (N, in_channels), jnp.float32)
    edge_attr = jax.random.normal(k_ea, (E, edge_dim), jnp.float32)

    # Dense conversion glue (indexed [dst, src])
    src, dst = edge_index[0], edge_index[1]
    adj_mask = jnp.zeros((N, N), jnp.float32).at[dst, src].set(1.0)
    edge_attr_dense = jnp.zeros((N, N, edge_dim), jnp.float32).at[dst, src].set(edge_attr)

    # global_mean_pool helpers
    onehot = jnp.zeros((G, N), jnp.float32).at[batch, jnp.arange(N)].set(1.0)
    inv_counts = 1.0 / jnp.sum(onehot, axis=1, keepdims=True)

    # Parameters
    fc1_ks = jax.random.split(k_fc1, 2)
    fc2_ks = jax.random.split(k_fc2, 2)
    params = dict(
        layers=[
            make_layer_params(k_l0, in_channels, heads, hidden_channels, edge_dim),
            make_layer_params(k_l1, HC, heads, hidden_channels, edge_dim),
        ][:num_layers],
        fc1_w=jax.random.normal(fc1_ks[0], (HC, hidden_channels), jnp.float32) * 0.1,
        fc1_b=jax.random.normal(fc1_ks[1], (1, hidden_channels), jnp.float32) * 0.1,
        fc2_w=jax.random.normal(fc2_ks[0], (hidden_channels, out_channels), jnp.float32) * 0.1,
        fc2_b=jax.random.normal(fc2_ks[1], (1, out_channels), jnp.float32) * 0.1,
    )

    out = solubility_forward(x, adj_mask, edge_attr_dense, onehot, inv_counts, params,
                             heads=heads, hidden_channels=hidden_channels)
    out = jax.block_until_ready(out)
    assert out.shape == (G, out_channels)
    assert bool(jnp.all(jnp.isfinite(out)))
    print("KERNEL_OK")
</pallas_src>

<mosaic_0001>
module attributes {stable_mosaic.version = 11 : i64} {
  func.func @fused_layer_kernel(%arg0: i32, %arg1: memref<8x4xf32, #tpu.memory_space<vmem>>, %arg2: memref<8x4xf32, #tpu.memory_space<vmem>>, %arg3: memref<8x8xf32, #tpu.memory_space<vmem>>, %arg4: memref<8x8x4xf32, #tpu.memory_space<vmem>>, %arg5: memref<4x32xf32, #tpu.memory_space<vmem>>, %arg6: memref<1x32xf32, #tpu.memory_space<vmem>>, %arg7: memref<4x32xf32, #tpu.memory_space<vmem>>, %arg8: memref<1x32xf32, #tpu.memory_space<vmem>>, %arg9: memref<4x16xf32, #tpu.memory_space<vmem>>, %arg10: memref<1x16xf32, #tpu.memory_space<vmem>>, %arg11: memref<1x16xf32, #tpu.memory_space<vmem>>, %arg12: memref<1x16xf32, #tpu.memory_space<vmem>>, %arg13: memref<1x16xf32, #tpu.memory_space<vmem>>, %arg14: memref<8x16xf32, #tpu.memory_space<vmem>>, %arg15: memref<8x16xf32, #tpu.memory_space<vmem>>) attributes {dimension_semantics = [#tpu.dimension_semantics<parallel>], iteration_bounds = array<i64: 1>, scalar_prefetch = 0 : i64, scratch_operands = 1 : i64, tpu.core_type = #tpu.core_type<tc>, window_params = [{pipeline_mode = #tpu.pipeline_mode<synchronous>, transform_indices = @transform_0, window_bounds = array<i64: 8, 4>}, {transform_indices = @transform_1, window_bounds = array<i64: 8, 4>}, {transform_indices = @transform_2, window_bounds = array<i64: 8, 8>}, {transform_indices = @transform_3, window_bounds = array<i64: 8, 8, 4>}, {pipeline_mode = #tpu.pipeline_mode<synchronous>, transform_indices = @transform_4, window_bounds = array<i64: 4, 32>}, {pipeline_mode = #tpu.pipeline_mode<synchronous>, transform_indices = @transform_5, window_bounds = array<i64: 1, 32>}, {pipeline_mode = #tpu.pipeline_mode<synchronous>, transform_indices = @transform_6, window_bounds = array<i64: 4, 32>}, {pipeline_mode = #tpu.pipeline_mode<synchronous>, transform_indices = @transform_7, window_bounds = array<i64: 1, 32>}, {pipeline_mode = #tpu.pipeline_mode<synchronous>, transform_indices = @transform_8, window_bounds = array<i64: 4, 16>}, {pipeline_mode = #tpu.pipeline_mode<synchronous>, transform_indices = @transform_9, window_bounds = array<i64: 1, 16>}, {pipeline_mode = #tpu.pipeline_mode<synchronous>, transform_indices = @transform_10, window_bounds = array<i64: 1, 16>}, {pipeline_mode = #tpu.pipeline_mode<synchronous>, transform_indices = @transform_11, window_bounds = array<i64: 1, 16>}, {pipeline_mode = #tpu.pipeline_mode<synchronous>, transform_indices = @transform_12, window_bounds = array<i64: 1, 16>}, {transform_indices = @transform_13, window_bounds = array<i64: 8, 16>}]} {
    %c0 = arith.constant 0 : index
    %c0_0 = arith.constant 0 : index
    %0 = vector.load %arg1[%c0, %c0_0] : memref<8x4xf32, #tpu.memory_space<vmem>>, vector<8x4xf32>
    %c0_1 = arith.constant 0 : index
    %c0_2 = arith.constant 0 : index
    %1 = vector.load %arg2[%c0_1, %c0_2] : memref<8x4xf32, #tpu.memory_space<vmem>>, vector<8x4xf32>
    %c0_3 = arith.constant 0 : index
    %c0_4 = arith.constant 0 : index
    %2 = vector.load %arg5[%c0_3, %c0_4] : memref<4x32xf32, #tpu.memory_space<vmem>>, vector<4x32xf32>
    %cst = arith.constant dense<0.000000e+00> : vector<8x32xf32>
    %3 = tpu.matmul %1, %2, %cst {dimension_numbers = #tpu.dot_dimension_numbers<[1], [0], [0], [1], [0, 0, 1, 1], [], []>} : vector<8x4xf32>, vector<4x32xf32>, vector<8x32xf32> -> vector<8x32xf32>
    %c0_5 = arith.constant 0 : index
    %c0_6 = arith.constant 0 : index
    %4 = vector.load %arg6[%c0_5, %c0_6] : memref<1x32xf32, #tpu.memory_space<vmem>>, vector<1x32xf32>
    %5 = vector.broadcast %4 : vector<1x32xf32> to vector<8x32xf32>
    %6 = arith.addf %3, %5 : vector<8x32xf32>
    %c0_7 = arith.constant 0 : index
    %c0_8 = arith.constant 0 : index
    %7 = vector.load %arg7[%c0_7, %c0_8] : memref<4x32xf32, #tpu.memory_space<vmem>>, vector<4x32xf32>
    %cst_9 = arith.constant dense<0.000000e+00> : vector<8x32xf32>
    %8 = tpu.matmul %0, %7, %cst_9 {dimension_numbers = #tpu.dot_dimension_numbers<[1], [0], [0], [1], [0, 0, 1, 1], [], []>} : vector<8x4xf32>, vector<4x32xf32>, vector<8x32xf32> -> vector<8x32xf32>
    %c0_10 = arith.constant 0 : index
    %c0_11 = arith.constant 0 : index
    %9 = vector.load %arg8[%c0_10, %c0_11] : memref<1x32xf32, #tpu.memory_space<vmem>>, vector<1x32xf32>
    %10 = vector.broadcast %9 : vector<1x32xf32> to vector<8x32xf32>
    %11 = arith.addf %8, %10 : vector<8x32xf32>
    %12 = vector.extract_strided_slice %6 {offsets = [0, 0], sizes = [8, 16], strides = [1, 1]} : vector<8x32xf32> to vector<8x16xf32>
    %13 = vector.extract_strided_slice %6 {offsets = [0, 16], sizes = [8, 16], strides = [1, 1]} : vector<8x32xf32> to vector<8x16xf32>
    %14 = vector.extract_strided_slice %11 {offsets = [0, 0], sizes = [8, 16], strides = [1, 1]} : vector<8x32xf32> to vector<8x16xf32>
    %15 = vector.extract_strided_slice %11 {offsets = [0, 16], sizes = [8, 16], strides = [1, 1]} : vector<8x32xf32> to vector<8x16xf32>
    %c0_12 = arith.constant 0 : index
    %c0_13 = arith.constant 0 : index
    %c0_14 = arith.constant 0 : index
    %16 = vector.load %arg4[%c0_12, %c0_13, %c0_14] : memref<8x8x4xf32, #tpu.memory_space<vmem>>, vector<8x8x4xf32>
    %c0_15 = arith.constant 0 : index
    %c0_16 = arith.constant 0 : index
    %17 = vector.load %arg3[%c0_15, %c0_16] : memref<8x8xf32, #tpu.memory_space<vmem>>, vector<8x8xf32>
    %cst_17 = arith.constant 0.000000e+00 : f32
    %18 = vector.broadcast %cst_17 : f32 to vector<8x8xf32>
    %19 = arith.cmpf ogt, %17, %18 : vector<8x8xf32>
    %20 = vector.extract_strided_slice %12 {offsets = [0, 0], sizes = [8, 8], strides = [1, 1]} : vector<8x16xf32> to vector<8x8xf32>
    %21 = vector.extract_strided_slice %14 {offsets = [0, 0], sizes = [8, 8], strides = [1, 1]} : vector<8x16xf32> to vector<8x8xf32>
    %22 = vector.extract_strided_slice %15 {offsets = [0, 0], sizes = [8, 8], strides = [1, 1]} : vector<8x16xf32> to vector<8x8xf32>
    %c0_18 = arith.constant 0 : index
    %c0_19 = arith.constant 0 : index
    %23 = vector.load %arg9[%c0_18, %c0_19] : memref<4x16xf32, #tpu.memory_space<vmem>>, vector<4x8xf32>
    %cst_20 = arith.constant dense<0.000000e+00> : vector<8x4xf32>
    %24 = tpu.matmul %20, %23, %cst_20 {dimension_numbers = #tpu.dot_dimension_numbers<[1], [1], [0], [0], [0, 0, 1, 0], [], []>} : vector<8x8xf32>, vector<4x8xf32>, vector<8x4xf32> -> vector<8x4xf32>
    %cst_21 = arith.constant dense<0.000000e+00> : vector<8x8xf32>
    %25 = tpu.matmul %20, %21, %cst_21 {dimension_numbers = #tpu.dot_dimension_numbers<[1], [1], [0], [0], [0, 0, 1, 0], [], []>} : vector<8x8xf32>, vector<8x8xf32>, vector<8x8xf32> -> vector<8x8xf32>
    %26 = vector.shape_cast %24 : vector<8x4xf32> to vector<8x1x4xf32>
    %27 = vector.broadcast %26 : vector<8x1x4xf32> to vector<8x8x4xf32>
    %28 = arith.mulf %16, %27 : vector<8x8x4xf32>
    %cst_22 = arith.constant dense<0.000000e+00> : vector<8x8xf32>
    %29 = vector.multi_reduction <add>, %28, %cst_22 [2] : vector<8x8x4xf32> to vector<8x8xf32>
    %30 = arith.addf %25, %29 : vector<8x8xf32>
    %cst_23 = arith.constant 0.353553385 : f32
    %31 = vector.broadcast %cst_23 : f32 to vector<8x8xf32>
    %32 = arith.mulf %30, %31 : vector<8x8xf32>
    %cst_24 = arith.constant -1.000000e+30 : f32
    %33 = vector.broadcast %cst_24 : f32 to vector<8x8xf32>
    %34 = arith.select %19, %32, %33 : vector<8x8xi1>, vector<8x8xf32>
    %cst_25 = arith.constant dense<0xFF800000> : vector<8xf32>
    %35 = vector.multi_reduction <maximumf>, %34, %cst_25 [1] : vector<8x8xf32> to vector<8xf32>
    %36 = vector.shape_cast %35 : vector<8xf32> to vector<8x1xf32>
    %37 = vector.broadcast %36 : vector<8x1xf32> to vector<8x8xf32>
    %38 = arith.subf %34, %37 : vector<8x8xf32>
    %39 = math.exp %38 : vector<8x8xf32>
    %cst_26 = arith.constant 0.000000e+00 : f32
    %40 = vector.broadcast %cst_26 : f32 to vector<8x8xf32>
    %41 = arith.select %19, %39, %40 : vector<8x8xi1>, vector<8x8xf32>
    %cst_27 = arith.constant dense<0.000000e+00> : vector<8xf32>
    %42 = vector.multi_reduction <add>, %41, %cst_27 [1] : vector<8x8xf32> to vector<8xf32>
    %43 = vector.shape_cast %42 : vector<8xf32> to vector<8x1xf32>
    %cst_28 = arith.constant 0.000000e+00 : f32
    %44 = vector.broadcast %cst_28 : f32 to vector<8x1xf32>
    %45 = arith.cmpf ogt, %43, %44 : vector<8x1xf32>
    %cst_29 = arith.constant 1.000000e+00 : f32
    %46 = vector.broadcast %cst_29 : f32 to vector<8x1xf32>
    %47 = arith.select %45, %43, %46 : vector<8x1xi1>, vector<8x1xf32>
    %48 = tpu.reciprocal %47 {approx = true} : vector<8x1xf32> -> vector<8x1xf32>
    %49 = vector.broadcast %48 : vector<8x1xf32> to vector<8x8xf32>
    %50 = arith.mulf %41, %49 : vector<8x8xf32>
    %51 = vector.shape_cast %50 : vector<8x8xf32> to vector<8x8x1xf32>
    %52 = vector.broadcast %51 : vector<8x8x1xf32> to vector<8x8x4xf32>
    %53 = arith.mulf %52, %16 : vector<8x8x4xf32>
    %cst_30 = arith.constant dense<0.000000e+00> : vector<8x4xf32>
    %54 = vector.multi_reduction <add>, %53, %cst_30 [1] : vector<8x8x4xf32> to vector<8x4xf32>
    %cst_31 = arith.constant dense<0.000000e+00> : vector<8x8xf32>
    %55 = tpu.matmul %50, %22, %cst_31 {dimension_numbers = #tpu.dot_dimension_numbers<[1], [0], [0], [1], [0, 0, 1, 1], [], []>} : vector<8x8xf32>, vector<8x8xf32>, vector<8x8xf32> -> vector<8x8xf32>
    %cst_32 = arith.constant dense<0.000000e+00> : vector<8x8xf32>
    %56 = tpu.matmul %54, %23, %cst_32 {dimension_numbers = #tpu.dot_dimension_numbers<[1], [0], [0], [1], [0, 0, 1, 1], [], []>} : vector<8x4xf32>, vector<4x8xf32>, vector<8x8xf32> -> vector<8x8xf32>
    %57 = arith.addf %55, %56 : vector<8x8xf32>
    %c0_33 = arith.constant 0 : index
    %c0_34 = arith.constant 0 : index
    %58 = vector.load %arg15[%c0_33, %c0_34] : memref<8x16xf32, #tpu.memory_space<vmem>>, vector<8x8xf32>
    tpu.vector_store %arg15[%c0_33, %c0_34], %57 {strides = array<i32>} : memref<8x16xf32, #tpu.memory_space<vmem>>, vector<8x8xf32>,
    %59 = vector.extract_strided_slice %12 {offsets = [0, 8], sizes = [8, 8], strides = [1, 1]} : vector<8x16xf32> to vector<8x8xf32>
    %60 = vector.extract_strided_slice %14 {offsets = [0, 8], sizes = [8, 8], strides = [1, 1]} : vector<8x16xf32> to vector<8x8xf32>
    %61 = vector.extract_strided_slice %15 {offsets = [0, 8], sizes = [8, 8], strides = [1, 1]} : vector<8x16xf32> to vector<8x8xf32>
    %c0_35 = arith.constant 0 : index
    %c8 = arith.constant 8 : index
    %62 = vector.load %arg9[%c0_35, %c8] : memref<4x16xf32, #tpu.memory_space<vmem>>, vector<4x8xf32>
    %cst_36 = arith.constant dense<0.000000e+00> : vector<8x4xf32>
    %63 = tpu.matmul %59, %62, %cst_36 {dimension_numbers = #tpu.dot_dimension_numbers<[1], [1], [0], [0], [0, 0, 1, 0], [], []>} : vector<8x8xf32>, vector<4x8xf32>, vector<8x4xf32> -> vector<8x4xf32>
    %cst_37 = arith.constant dense<0.000000e+00> : vector<8x8xf32>
    %64 = tpu.matmul %59, %60, %cst_37 {dimension_numbers = #tpu.dot_dimension_numbers<[1], [1], [0], [0], [0, 0, 1, 0], [], []>} : vector<8x8xf32>, vector<8x8xf32>, vector<8x8xf32> -> vector<8x8xf32>
    %65 = vector.shape_cast %63 : vector<8x4xf32> to vector<8x1x4xf32>
    %66 = vector.broadcast %65 : vector<8x1x4xf32> to vector<8x8x4xf32>
    %67 = arith.mulf %16, %66 : vector<8x8x4xf32>
    %cst_38 = arith.constant dense<0.000000e+00> : vector<8x8xf32>
    %68 = vector.multi_reduction <add>, %67, %cst_38 [2] : vector<8x8x4xf32> to vector<8x8xf32>
    %69 = arith.addf %64, %68 : vector<8x8xf32>
    %cst_39 = arith.constant 0.353553385 : f32
    %70 = vector.broadcast %cst_39 : f32 to vector<8x8xf32>
    %71 = arith.mulf %69, %70 : vector<8x8xf32>
    %cst_40 = arith.constant -1.000000e+30 : f32
    %72 = vector.broadcast %cst_40 : f32 to vector<8x8xf32>
    %73 = arith.select %19, %71, %72 : vector<8x8xi1>, vector<8x8xf32>
    %cst_41 = arith.constant dense<0xFF800000> : vector<8xf32>
    %74 = vector.multi_reduction <maximumf>, %73, %cst_41 [1] : vector<8x8xf32> to vector<8xf32>
    %75 = vector.shape_cast %74 : vector<8xf32> to vector<8x1xf32>
    %76 = vector.broadcast %75 : vector<8x1xf32> to vector<8x8xf32>
    %77 = arith.subf %73, %76 : vector<8x8xf32>
    %78 = math.exp %77 : vector<8x8xf32>
    %cst_42 = arith.constant 0.000000e+00 : f32
    %79 = vector.broadcast %cst_42 : f32 to vector<8x8xf32>
    %80 = arith.select %19, %78, %79 : vector<8x8xi1>, vector<8x8xf32>
    %cst_43 = arith.constant dense<0.000000e+00> : vector<8xf32>
    %81 = vector.multi_reduction <add>, %80, %cst_43 [1] : vector<8x8xf32> to vector<8xf32>
    %82 = vector.shape_cast %81 : vector<8xf32> to vector<8x1xf32>
    %cst_44 = arith.constant 0.000000e+00 : f32
    %83 = vector.broadcast %cst_44 : f32 to vector<8x1xf32>
    %84 = arith.cmpf ogt, %82, %83 : vector<8x1xf32>
    %cst_45 = arith.constant 1.000000e+00 : f32
    %85 = vector.broadcast %cst_45 : f32 to vector<8x1xf32>
    %86 = arith.select %84, %82, %85 : vector<8x1xi1>, vector<8x1xf32>
    %87 = tpu.reciprocal %86 {approx = true} : vector<8x1xf32> -> vector<8x1xf32>
    %88 = vector.broadcast %87 : vector<8x1xf32> to vector<8x8xf32>
    %89 = arith.mulf %80, %88 : vector<8x8xf32>
    %90 = vector.shape_cast %89 : vector<8x8xf32> to vector<8x8x1xf32>
    %91 = vector.broadcast %90 : vector<8x8x1xf32> to vector<8x8x4xf32>
    %92 = arith.mulf %91, %16 : vector<8x8x4xf32>
    %cst_46 = arith.constant dense<0.000000e+00> : vector<8x4xf32>
    %93 = vector.multi_reduction <add>, %92, %cst_46 [1] : vector<8x8x4xf32> to vector<8x4xf32>
    %cst_47 = arith.constant dense<0.000000e+00> : vector<8x8xf32>
    %94 = tpu.matmul %89, %61, %cst_47 {dimension_numbers = #tpu.dot_dimension_numbers<[1], [0], [0], [1], [0, 0, 1, 1], [], []>} : vector<8x8xf32>, vector<8x8xf32>, vector<8x8xf32> -> vector<8x8xf32>
    %cst_48 = arith.constant dense<0.000000e+00> : vector<8x8xf32>
    %95 = tpu.matmul %93, %62, %cst_48 {dimension_numbers = #tpu.dot_dimension_numbers<[1], [0], [0], [1], [0, 0, 1, 1], [], []>} : vector<8x4xf32>, vector<4x8xf32>, vector<8x8xf32> -> vector<8x8xf32>
    %96 = arith.addf %94, %95 : vector<8x8xf32>
    %c0_49 = arith.constant 0 : index
    %c8_50 = arith.constant 8 : index
    %97 = vector.load %arg15[%c0_49, %c8_50] : memref<8x16xf32, #tpu.memory_space<vmem>>, vector<8x8xf32>
    tpu.vector_store %arg15[%c0_49, %c8_50], %96 {strides = array<i32>} : memref<8x16xf32, #tpu.memory_space<vmem>>, vector<8x8xf32>,
    %c0_51 = arith.constant 0 : index
    %c0_52 = arith.constant 0 : index
    %98 = vector.load %arg15[%c0_51, %c0_52] : memref<8x16xf32, #tpu.memory_space<vmem>>, vector<8x16xf32>
    %99 = arith.addf %98, %13 : vector<8x16xf32>
    %c0_53 = arith.constant 0 : index
    %c0_54 = arith.constant 0 : index
    %100 = vector.load %arg13[%c0_53, %c0_54] : memref<1x16xf32, #tpu.memory_space<vmem>>, vector<1x16xf32>
    %cst_55 = arith.constant 9.99999974E-6 : f32
    %101 = vector.broadcast %cst_55 : f32 to vector<1x16xf32>
    %102 = arith.addf %100, %101 : vector<1x16xf32>
    %103 = math.rsqrt %102 : vector<1x16xf32>
    %c0_56 = arith.constant 0 : index
    %c0_57 = arith.constant 0 : index
    %104 = vector.load %arg12[%c0_56, %c0_57] : memref<1x16xf32, #tpu.memory_space<vmem>>, vector<1x16xf32>
    %105 = vector.broadcast %104 : vector<1x16xf32> to vector<8x16xf32>
    %106 = arith.subf %99, %105 : vector<8x16xf32>
    %107 = vector.broadcast %103 : vector<1x16xf32> to vector<8x16xf32>
    %108 = arith.mulf %106, %107 : vector<8x16xf32>
    %c0_58 = arith.constant 0 : index
    %c0_59 = arith.constant 0 : index
    %109 = vector.load %arg10[%c0_58, %c0_59] : memref<1x16xf32, #tpu.memory_space<vmem>>, vector<1x16xf32>
    %110 = vector.broadcast %109 : vector<1x16xf32> to vector<8x16xf32>
    %111 = arith.mulf %108, %110 : vector<8x16xf32>
    %c0_60 = arith.constant 0 : index
    %c0_61 = arith.constant 0 : index
    %112 = vector.load %arg11[%c0_60, %c0_61] : memref<1x16xf32, #tpu.memory_space<vmem>>, vector<1x16xf32>
    %113 = vector.broadcast %112 : vector<1x16xf32> to vector<8x16xf32>
    %114 = arith.addf %111, %113 : vector<8x16xf32>
    %cst_62 = arith.constant 0.000000e+00 : f32
    %115 = vector.broadcast %cst_62 : f32 to vector<8x16xf32>
    %116 = arith.maximumf %114, %115 : vector<8x16xf32>
    %c0_63 = arith.constant 0 : index
    %c0_64 = arith.constant 0 : index
    %117 = vector.load %arg14[%c0_63, %c0_64] : memref<8x16xf32, #tpu.memory_space<vmem>>, vector<8x16xf32>
    tpu.vector_store %arg14[%c0_63, %c0_64], %116 {strides = array<i32>} : memref<8x16xf32, #tpu.memory_space<vmem>>, vector<8x16xf32>,
    return
  }
  func.func @transform_0(%arg0: i32) -> (i32, i32) {
    %c0_i32 = arith.constant 0 : i32
    %c0_i32_0 = arith.constant 0 : i32
    %c0_i32_1 = arith.constant 0 : i32
    return %c0_i32, %c0_i32_0 : i32, i32
  }
  func.func @transform_1(%arg0: i32) -> (i32, i32) {
    %c0_i32 = arith.constant 0 : i32
    %c0_i32_0 = arith.constant 0 : i32
    return %arg0, %c0_i32 : i32, i32
  }
  func.func @transform_2(%arg0: i32) -> (i32, i32) {
    %c0_i32 = arith.constant 0 : i32
    %c0_i32_0 = arith.constant 0 : i32
    return %arg0, %c0_i32 : i32, i32
  }
  func.func @transform_3(%arg0: i32) -> (i32, i32, i32) {
    %c0_i32 = arith.constant 0 : i32
    %c0_i32_0 = arith.constant 0 : i32
    %c0_i32_1 = arith.constant 0 : i32
    return %arg0, %c0_i32, %c0_i32_0 : i32, i32, i32
  }
  func.func @transform_4(%arg0: i32) -> (i32, i32) {
    %c0_i32 = arith.constant 0 : i32
    %c0_i32_0 = arith.constant 0 : i32
    %c0_i32_1 = arith.constant 0 : i32
    return %c0_i32, %c0_i32_0 : i32, i32
  }
  func.func @transform_5(%arg0: i32) -> (i32, i32) {
    %c0_i32 = arith.constant 0 : i32
    %c0_i32_0 = arith.constant 0 : i32
    %c0_i32_1 = arith.constant 0 : i32
    return %c0_i32, %c0_i32_0 : i32, i32
  }
  func.func @transform_6(%arg0: i32) -> (i32, i32) {
    %c0_i32 = arith.constant 0 : i32
    %c0_i32_0 = arith.constant 0 : i32
    %c0_i32_1 = arith.constant 0 : i32
    return %c0_i32, %c0_i32_0 : i32, i32
  }
  func.func @transform_7(%arg0: i32) -> (i32, i32) {
    %c0_i32 = arith.constant 0 : i32
    %c0_i32_0 = arith.constant 0 : i32
    %c0_i32_1 = arith.constant 0 : i32
    return %c0_i32, %c0_i32_0 : i32, i32
  }
  func.func @transform_8(%arg0: i32) -> (i32, i32) {
    %c0_i32 = arith.constant 0 : i32
    %c0_i32_0 = arith.constant 0 : i32
    %c0_i32_1 = arith.constant 0 : i32
    return %c0_i32, %c0_i32_0 : i32, i32
  }
  func.func @transform_9(%arg0: i32) -> (i32, i32) {
    %c0_i32 = arith.constant 0 : i32
    %c0_i32_0 = arith.constant 0 : i32
    %c0_i32_1 = arith.constant 0 : i32
    return %c0_i32, %c0_i32_0 : i32, i32
  }
  func.func @transform_10(%arg0: i32) -> (i32, i32) {
    %c0_i32 = arith.constant 0 : i32
    %c0_i32_0 = arith.constant 0 : i32
    %c0_i32_1 = arith.constant 0 : i32
    return %c0_i32, %c0_i32_0 : i32, i32
  }
  func.func @transform_11(%arg0: i32) -> (i32, i32) {
    %c0_i32 = arith.constant 0 : i32
    %c0_i32_0 = arith.constant 0 : i32
    %c0_i32_1 = arith.constant 0 : i32
    return %c0_i32, %c0_i32_0 : i32, i32
  }
  func.func @transform_12(%arg0: i32) -> (i32, i32) {
    %c0_i32 = arith.constant 0 : i32
    %c0_i32_0 = arith.constant 0 : i32
    %c0_i32_1 = arith.constant 0 : i32
    return %c0_i32, %c0_i32_0 : i32, i32
  }
  func.func @transform_13(%arg0: i32) -> (i32, i32) {
    %c0_i32 = arith.constant 0 : i32
    %c0_i32_0 = arith.constant 0 : i32
    return %arg0, %c0_i32 : i32, i32
  }
}

</mosaic_0001>

<llo_original>
// kernel: tpu_custom_call.1
$region0: #{tpu_custom_call.1}
  #allocation0 [shape = 'u32[]', space=smem, size = 0x4, offset = 0x4, fixed_abs, tag = 'smem constant byte address 0x4 - core index']
  #allocation1 [shape = 'u32[72,128]{1,0:T(1,128)}', space=vmem, size = 0x9000, scoped, tag = 'internal scratch']
  #allocation2 [shape = 'f32[8,16]{1,0:T(8,128)}', space=vmem, size = 0x1000, scoped, tag = 'scratch operand']
  %s0 = inlined_call_operand.vmem [shape: f32[8,4], index: 0, kind: input, shape index: {}]
  %s1 = inlined_call_operand.vmem [shape: f32[8,4], index: 1, kind: input, shape index: {}]
  %s2 = inlined_call_operand.vmem [shape: f32[8,8], index: 2, kind: input, shape index: {}]
  %s3 = inlined_call_operand.vmem [shape: f32[8,8,4], index: 3, kind: input, shape index: {}]
  %s4 = inlined_call_operand.vmem [shape: f32[4,32], index: 4, kind: input, shape index: {}]
  %s5 = inlined_call_operand.vmem [shape: f32[1,32], index: 5, kind: input, shape index: {}]
  %s6 = inlined_call_operand.vmem [shape: f32[4,32], index: 6, kind: input, shape index: {}]
  %s7 = inlined_call_operand.vmem [shape: f32[1,32], index: 7, kind: input, shape index: {}]
  %s8 = inlined_call_operand.vmem [shape: f32[4,16], index: 8, kind: input, shape index: {}]
  %s9 = inlined_call_operand.vmem [shape: f32[1,16], index: 9, kind: input, shape index: {}]
  %s10 = inlined_call_operand.vmem [shape: f32[1,16], index: 10, kind: input, shape index: {}]
  %s11 = inlined_call_operand.vmem [shape: f32[1,16], index: 11, kind: input, shape index: {}]
  %s12 = inlined_call_operand.vmem [shape: f32[1,16], index: 12, kind: input, shape index: {}]
  %s13 = inlined_call_operand.hbm [shape: f32[8,16], index: 13, kind: output, shape index: {}]
  %s14 = sld [smem:[#allocation0]]
  $region62: #{tpu_custom_call.1} parent=0
    _
  %s16 = ssub.s32 1, %s14
  %s17 = scalar_select 0, %s16, %s14
  $region1: #{tpu_custom_call.1} parent=0
    #allocation3 [shape = 'u8[4096]{0}', space=vmem, size = 0x1000, scoped, tag = 'output window, operand 0, single buffered']
    #allocation4 [shape = 's32[1]{0}', space=sflag, size = 0x4, scoped, tag = 'scoped memory for tpu_custom_call.1']
    %18 = vsyncpa [#allocation4], 0
    // Predicated region
    $region2: #{tpu_custom_call.1} parent=1 // pred_check
      _
    $region3: #{tpu_custom_call.1} parent=1 // pred_check_branch
      %20 = sbr.rel (0) target = $region5
    $region4: #{tpu_custom_call.1} parent=1 // pred_region
      _
    $region5: #{tpu_custom_call.1} parent=1 // pred_fallthru
      _
    // Predicated region
    $region6: #{tpu_custom_call.1} parent=1 // pred_check
      _
    $region7: #{tpu_custom_call.1} parent=1 // pred_check_branch
      %22 = sbr.rel (0) target = $region9
    $region8: #{tpu_custom_call.1} parent=1 // pred_region
      _
    $region9: #{tpu_custom_call.1} parent=1 // pred_fallthru
      _
    // Predicated region
    $region10: #{tpu_custom_call.1} parent=1 // pred_check
      _
    $region11: #{tpu_custom_call.1} parent=1 // pred_check_branch
      %24 = sbr.rel (0) target = $region13
    $region12: #{tpu_custom_call.1} parent=1 // pred_region
      _
    $region13: #{tpu_custom_call.1} parent=1 // pred_fallthru
      _
    // Predicated region
    $region14: #{tpu_custom_call.1} parent=1 // pred_check
      _
    $region15: #{tpu_custom_call.1} parent=1 // pred_check_branch
      %26 = sbr.rel (0) target = $region17
    $region16: #{tpu_custom_call.1} parent=1 // pred_region
      _
    $region17: #{tpu_custom_call.1} parent=1 // pred_fallthru
      _
    // Predicated region
    $region18: #{tpu_custom_call.1} parent=1 // pred_check
      _
    $region19: #{tpu_custom_call.1} parent=1 // pred_check_branch
      %28 = sbr.rel (0) target = $region21
    $region20: #{tpu_custom_call.1} parent=1 // pred_region
      _
    $region21: #{tpu_custom_call.1} parent=1 // pred_fallthru
      _
    // Predicated region
    $region22: #{tpu_custom_call.1} parent=1 // pred_check
      _
    $region23: #{tpu_custom_call.1} parent=1 // pred_check_branch
      %30 = sbr.rel (0) target = $region25
    $region24: #{tpu_custom_call.1} parent=1 // pred_region
      _
    $region25: #{tpu_custom_call.1} parent=1 // pred_fallthru
      _
    // Predicated region
    $region26: #{tpu_custom_call.1} parent=1 // pred_check
      _
    $region27: #{tpu_custom_call.1} parent=1 // pred_check_branch
      %32 = sbr.rel (0) target = $region29
    $region28: #{tpu_custom_call.1} parent=1 // pred_region
      _
    $region29: #{tpu_custom_call.1} parent=1 // pred_fallthru
      _
    // Predicated region
    $region30: #{tpu_custom_call.1} parent=1 // pred_check
      _
    $region31: #{tpu_custom_call.1} parent=1 // pred_check_branch
      %34 = sbr.rel (0) target = $region33
    $region32: #{tpu_custom_call.1} parent=1 // pred_region
      _
    $region33: #{tpu_custom_call.1} parent=1 // pred_fallthru
      _
    // Predicated region
    $region34: #{tpu_custom_call.1} parent=1 // pred_check
      _
    $region35: #{tpu_custom_call.1} parent=1 // pred_check_branch
      %36 = sbr.rel (0) target = $region37
    $region36: #{tpu_custom_call.1} parent=1 // pred_region
      _
    $region37: #{tpu_custom_call.1} parent=1 // pred_fallthru
      _
    // Predicated region
    $region38: #{tpu_custom_call.1} parent=1 // pred_check
      _
    $region39: #{tpu_custom_call.1} parent=1 // pred_check_branch
      %38 = sbr.rel (0) target = $region41
    $region40: #{tpu_custom_call.1} parent=1 // pred_region
      _
    $region41: #{tpu_custom_call.1} parent=1 // pred_fallthru
      _
    // Predicated region
    $region42: #{tpu_custom_call.1} parent=1 // pred_check
      _
    $region43: #{tpu_custom_call.1} parent=1 // pred_check_branch
      %40 = sbr.rel (0) target = $region45
    $region44: #{tpu_custom_call.1} parent=1 // pred_region
      _
    $region45: #{tpu_custom_call.1} parent=1 // pred_fallthru
      _
    // Predicated region
    $region46: #{tpu_custom_call.1} parent=1 // pred_check
      _
    $region47: #{tpu_custom_call.1} parent=1 // pred_check_branch
      %42 = sbr.rel (0) target = $region49
    $region48: #{tpu_custom_call.1} parent=1 // pred_region
      _
    $region49: #{tpu_custom_call.1} parent=1 // pred_fallthru
      _
    // Predicated region
    $region50: #{tpu_custom_call.1} parent=1 // pred_check
      _
    $region51: #{tpu_custom_call.1} parent=1 // pred_check_branch
      %44 = sbr.rel (0) target = $region53
    $region52: #{tpu_custom_call.1} parent=1 // pred_region
      _
    $region53: #{tpu_custom_call.1} parent=1 // pred_fallthru
      _
    %v45 = vld [vmem:[%s0] sm:$0xff]
    %v46 = vld [vmem:[%s1] sm:$0xff]
    %v47 = vld [vmem:[%s4] sm:$0xf]
    %v48 = vld [vmem:[%s5] sm:$0x1]
    %v50 = vperm.slane %v48, 0
    %vm52 = vcmask 31744
    %v54 = vsel %vm52, %v46, 0
    %vm56 = vcmask 1043456
    %v58 = vsel %vm56, %v47, 0
    %60 = vmatpush.msra.mxu0 0.0
    %61 = vmatpush.msra.mxu0 0.0
    %62 = vmatpush.msra.mxu0 0.0
    %63 = vmatpush.msra.mxu0 0.0
    %64 = vmatpush.msra.mxu0 0.0
    %65 = vmatpush.msra.mxu0 0.0
    %66 = vmatpush.msra.mxu0 0.0
    %67 = vmatpush.msra.mxu0 0.0
    %68 = vmatpush.msra.mxu0 0.0
    %69 = vmatpush.msra.mxu0 0.0
    %70 = vmatpush.msra.mxu0 0.0
    %71 = vmatpush.msra.mxu0 0.0
    %72 = vmatpush.msra.mxu0 0.0
    %73 = vmatpush.msra.mxu0 0.0
    %74 = vmatpush.msra.mxu0 0.0
    %75 = vmatpush.msra.mxu0 %v58
    %76 = vmatmul.f32.gmra.mxu0 %v54
    %v77 = vpop.f32.mrf.mxu0
    %v78 = vadd.f32 %v50, %v77
    %79 = vdwg.mxu0
    %v80 = vld [vmem:[%s6] sm:$0xf]
    %v81 = vld [vmem:[%s7] sm:$0x1]
    %v83 = vperm.slane %v81, 0
    %v86 = vsel %vm52, %v45, 0
    %v89 = vsel %vm56, %v80, 0
    %91 = vmatpush.msra.mxu0 0.0
    %92 = vmatpush.msra.mxu0 0.0
    %93 = vmatpush.msra.mxu0 0.0
    %94 = vmatpush.msra.mxu0 0.0
    %95 = vmatpush.msra.mxu0 0.0
    %96 = vmatpush.msra.mxu0 0.0
    %97 = vmatpush.msra.mxu0 0.0
    %98 = vmatpush.msra.mxu0 0.0
    %99 = vmatpush.msra.mxu0 0.0
    %100 = vmatpush.msra.mxu0 0.0
    %101 = vmatpush.msra.mxu0 0.0
    %102 = vmatpush.msra.mxu0 0.0
    %103 = vmatpush.msra.mxu0 0.0
    %104 = vmatpush.msra.mxu0 0.0
    %105 = vmatpush.msra.mxu0 0.0
    %106 = vmatpush.msra.mxu0 %v89
    %107 = vmatmul.f32.gmra.mxu0 %v86
    %v108 = vpop.f32.mrf.mxu0
    %v109 = vadd.f32 %v83, %v108
    %110 = vdwg.mxu0
    %v111 = vld [vmem:[%s3] sm:$0xff]
    %v112 = vld [vmem:[%s3 + $0x8] sm:$0xff]
    %v113 = vld [vmem:[%s3 + $0x10] sm:$0xff]
    %v114 = vld [vmem:[%s3 + $0x18] sm:$0xff]
    %v115 = vld [vmem:[%s3 + $0x20] sm:$0xff]
    %v116 = vld [vmem:[%s3 + $0x28] sm:$0xff]
    %v117 = vld [vmem:[%s3 + $0x30] sm:$0xff]
    %v118 = vld [vmem:[%s3 + $0x38] sm:$0xff]
    %v119 = vld [vmem:[%s2] sm:$0xff]
    %vm120 = vcmp.gt.f32.partialorder %v119, 0.0
    %v121 = vld [vmem:[%s8] sm:$0xf]
    %vm122 = vcmask 64512
    %v124 = vsel %vm122, %v78, 0
    %v127 = vsel %vm122, %v121, 0
    %129 = vmatpush.xpose.msra.mxu0 0.0
    %130 = vmatpush.xpose.msra.mxu0 0.0
    %131 = vmatpush.xpose.msra.mxu0 0.0
    %132 = vmatpush.xpose.msra.mxu0 0.0
    %133 = vmatpush.xpose.msra.mxu0 0.0
    %134 = vmatpush.xpose.msra.mxu0 0.0
    %135 = vmatpush.xpose.msra.mxu0 0.0
    %136 = vmatpush.xpose.msra.mxu0 0.0
    %137 = vmatpush.xpose.msra.mxu0 0.0
    %138 = vmatpush.xpose.msra.mxu0 0.0
    %139 = vmatpush.xpose.msra.mxu0 0.0
    %140 = vmatpush.xpose.msra.mxu0 0.0
    %141 = vmatpush.xpose.msra.mxu0 0.0
    %142 = vmatpush.xpose.msra.mxu0 0.0
    %143 = vmatpush.xpose.msra.mxu0 0.0
    %144 = vmatpush.xpose.msra.mxu0 %v127
    %145 = vmatmul.f32.gmra.mxu0 %v124
    %v146 = vpop.f32.mrf.mxu0
    %v147 = vadd.f32 0.0, %v146
    %148 = vdwg.mxu0
    %v150 = vrot.slane %v147, 1
    %v151 = vrot.slane %v147, 2
    %v152 = vrot.slane %v147, 3
    %v153 = vrot.slane %v147, 4
    %v154 = vrot.slane %v147, 5
    %v155 = vrot.slane %v147, 6
    %v156 = vrot.slane %v147, 7
    %v157 = vperm.slane %v147, 0
    %v158 = vperm.slane %v150, 0
    %v159 = vperm.slane %v151, 0
    %v160 = vperm.slane %v152, 0
    %v161 = vperm.slane %v153, 0
    %v162 = vperm.slane %v154, 0
    %v163 = vperm.slane %v155, 0
    %v164 = vperm.slane %v156, 0
    %v173 = vmul.f32 %v111, %v157
    %v174 = vmul.f32 %v112, %v158
    %v175 = vmul.f32 %v113, %v159
    %v176 = vmul.f32 %v114, %v160
    %v177 = vmul.f32 %v115, %v161
    %v178 = vmul.f32 %v116, %v162
    %v179 = vmul.f32 %v117, %v163
    %v180 = vmul.f32 %v118, %v164
    %v181 = vsel %vm52, %v173, 0.0
    %182 = vadd.xlane.f32.xlu0 %v181
    %v183 = vpop.xlane.xlu0 %182
    %v184 = vsel %vm52, %v174, 0.0
    %185 = vadd.xlane.f32.xlu0 %v184
    %v186 = vpop.xlane.xlu0 %185
    %v187 = vsel %vm52, %v175, 0.0
    %188 = vadd.xlane.f32.xlu0 %v187
    %v189 = vpop.xlane.xlu0 %188
    %v190 = vsel %vm52, %v176, 0.0
    %191 = vadd.xlane.f32.xlu0 %v190
    %v192 = vpop.xlane.xlu0 %191
    %v193 = vsel %vm52, %v177, 0.0
    %194 = vadd.xlane.f32.xlu0 %v193
    %v195 = vpop.xlane.xlu0 %194
    %v196 = vsel %vm52, %v178, 0.0
    %197 = vadd.xlane.f32.xlu0 %v196
    %v198 = vpop.xlane.xlu0 %197
    %v199 = vsel %vm52, %v179, 0.0
    %200 = vadd.xlane.f32.xlu0 %v199
    %v201 = vpop.xlane.xlu0 %200
    %v202 = vsel %vm52, %v180, 0.0
    %203 = vadd.xlane.f32.xlu0 %v202
    %v204 = vpop.xlane.xlu0 %203
    %v213 = vlaneseq
    %v214 = vand.u32 %v213, 127
    %v215 = vperm.slane %v183, %v214
    %v216 = vperm.slane %v186, %v214
    %v217 = vperm.slane %v189, %v214
    %v218 = vperm.slane %v192, %v214
    %v219 = vperm.slane %v195, %v214
    %v220 = vperm.slane %v198, %v214
    %v221 = vperm.slane %v201, %v214
    %v222 = vperm.slane %v204, %v214
    %vm223 = vcmask 1041409
    %v224 = vsel %vm223, %v216, %v215
    %vm225 = vcmask 1042434
    %v226 = vsel %vm225, %v217, %v224
    %vm227 = vcmask 1043459
    %v228 = vsel %vm227, %v218, %v226
    %vm229 = vcmask 1044484
    %v230 = vsel %vm229, %v219, %v228
    %vm231 = vcmask 1045509
    %v232 = vsel %vm231, %v220, %v230
    %vm233 = vcmask 1046534
    %v234 = vsel %vm233, %v221, %v232
    %vm235 = vcmask 1047559
    %v236 = vsel %vm235, %v222, %v234
    %v239 = vsel %vm122, %v109, 0
    %241 = vmatpush.xpose.msra.mxu0 0.0
    %242 = vmatpush.xpose.msra.mxu0 0.0
    %243 = vmatpush.xpose.msra.mxu0 0.0
    %244 = vmatpush.xpose.msra.mxu0 0.0
    %245 = vmatpush.xpose.msra.mxu0 0.0
    %246 = vmatpush.xpose.msra.mxu0 0.0
    %247 = vmatpush.xpose.msra.mxu0 0.0
    %248 = vmatpush.xpose.msra.mxu0 0.0
    %249 = vmatpush.xpose.msra.mxu0 0.0
    %250 = vmatpush.xpose.msra.mxu0 0.0
    %251 = vmatpush.xpose.msra.mxu0 0.0
    %252 = vmatpush.xpose.msra.mxu0 0.0
    %253 = vmatpush.xpose.msra.mxu0 0.0
    %254 = vmatpush.xpose.msra.mxu0 0.0
    %255 = vmatpush.xpose.msra.mxu0 0.0
    %256 = vmatpush.xpose.msra.mxu0 %v239
    %257 = vmatmul.f32.gmra.mxu0 %v124
    %v258 = vpop.f32.mrf.mxu0
    %v259 = vadd.f32 %v236, %v258
    %260 = vdwg.mxu0
    %v261 = vmul.f32 %v259, 0.35355338
    %v262 = vsel %vm120, %v261, -1e+30
    %v263 = vsel %vm122, %v262, -inf
    %264 = vmax.xlane.f32.xlu0 %v263
    %v265 = vpop.xlane.xlu0 %264
    %v266 = vsub.f32 %v262, %v265
    %v267 = vmul.f32 %v266, 1.442695
    %v268 = vpow.pop %v267
    %v269 = vsel %vm120, %v268, 0.0
    %v270 = vsel %vm122, %v269, 0.0
    %271 = vadd.xlane.f32.xlu0 %v270
    %v272 = vpop.xlane.xlu0 %271
    %vm273 = vcmp.gt.f32.partialorder %v272, 0.0
    %v274 = vsel %vm273, %v272, 1.0
    %v275 = vrcp.pop %v274
    %v276 = vmul.f32 %v269, %v275
    %v277 = vperm.slane %v276, 0
    %v278 = vlaneseq
    %v279 = vshrl.u32 %v278, 7
    %281 = vset.pattern.permute.xlu0 %v279
    %282 = vperm.xlu0 %281, %v277
    %v283 = vpop.permute.xlu0 %282
    %v284 = vperm.slane %v276, 1
    %v285 = vlaneseq
    %v286 = vshrl.u32 %v285, 7
    %288 = vset.pattern.permute.xlu0 %v286
    %289 = vperm.xlu0 %288, %v284
    %v290 = vpop.permute.xlu0 %289
    %v291 = vperm.slane %v276, 2
    %v292 = vlaneseq
    %v293 = vshrl.u32 %v292, 7
    %295 = vset.pattern.permute.xlu0 %v293
    %296 = vperm.xlu0 %295, %v291
    %v297 = vpop.permute.xlu0 %296
    %v298 = vperm.slane %v276, 3
    %v299 = vlaneseq
    %v300 = vshrl.u32 %v299, 7
    %302 = vset.pattern.permute.xlu0 %v300
    %303 = vperm.xlu0 %302, %v298
    %v304 = vpop.permute.xlu0 %303
    %v305 = vperm.slane %v276, 4
    %v306 = vlaneseq
    %v307 = vshrl.u32 %v306, 7
    %309 = vset.pattern.permute.xlu0 %v307
    %310 = vperm.xlu0 %309, %v305
    %v311 = vpop.permute.xlu0 %310
    %v312 = vperm.slane %v276, 5
    %v313 = vlaneseq
    %v314 = vshrl.u32 %v313, 7
    %316 = vset.pattern.permute.xlu0 %v314
    %317 = vperm.xlu0 %316, %v312
    %v318 = vpop.permute.xlu0 %317
    %v319 = vperm.slane %v276, 6
    %v320 = vlaneseq
    %v321 = vshrl.u32 %v320, 7
    %323 = vset.pattern.permute.xlu0 %v321
    %324 = vperm.xlu0 %323, %v319
    %v325 = vpop.permute.xlu0 %324
    %v326 = vperm.slane %v276, 7
    %v327 = vlaneseq
    %v328 = vshrl.u32 %v327, 7
    %330 = vset.pattern.permute.xlu0 %v328
    %331 = vperm.xlu0 %330, %v326
    %v332 = vpop.permute.xlu0 %331
    %v333 = vmul.f32 %v283, %v111
    %v334 = vmul.f32 %v290, %v112
    %v335 = vmul.f32 %v297, %v113
    %v336 = vmul.f32 %v304, %v114
    %v337 = vmul.f32 %v311, %v115
    %v338 = vmul.f32 %v318, %v116
    %v339 = vmul.f32 %v325, %v117
    %v340 = vmul.f32 %v332, %v118
    %v341 = vsel %vm52, %v333, 0.0
    %v342 = vrot.slane %v341, 4
    %v343 = vadd.f32 %v341, %v342
    %v344 = vrot.slane %v343, 2
    %v345 = vadd.f32 %v343, %v344
    %v346 = vrot.slane %v345, 1
    %v347 = vadd.f32 %v345, %v346
    %v348 = vsel %vm52, %v334, 0.0
    %v349 = vrot.slane %v348, 4
    %v350 = vadd.f32 %v348, %v349
    %v351 = vrot.slane %v350, 2
    %v352 = vadd.f32 %v350, %v351
    %v353 = vrot.slane %v352, 1
    %v354 = vadd.f32 %v352, %v353
    %v355 = vsel %vm52, %v335, 0.0
    %v356 = vrot.slane %v355, 4
    %v357 = vadd.f32 %v355, %v356
    %v358 = vrot.slane %v357, 2
    %v359 = vadd.f32 %v357, %v358
    %v360 = vrot.slane %v359, 1
    %v361 = vadd.f32 %v359, %v360
    %v362 = vsel %vm52, %v336, 0.0
    %v363 = vrot.slane %v362, 4
    %v364 = vadd.f32 %v362, %v363
    %v365 = vrot.slane %v364, 2
    %v366 = vadd.f32 %v364, %v365
    %v367 = vrot.slane %v366, 1
    %v368 = vadd.f32 %v366, %v367
    %v369 = vsel %vm52, %v337, 0.0
    %v370 = vrot.slane %v369, 4
    %v371 = vadd.f32 %v369, %v370
    %v372 = vrot.slane %v371, 2
    %v373 = vadd.f32 %v371, %v372
    %v374 = vrot.slane %v373, 1
    %v375 = vadd.f32 %v373, %v374
    %v376 = vsel %vm52, %v338, 0.0
    %v377 = vrot.slane %v376, 4
    %v378 = vadd.f32 %v376, %v377
    %v379 = vrot.slane %v378, 2
    %v380 = vadd.f32 %v378, %v379
    %v381 = vrot.slane %v380, 1
    %v382 = vadd.f32 %v380, %v381
    %v383 = vsel %vm52, %v339, 0.0
    %v384 = vrot.slane %v383, 4
    %v385 = vadd.f32 %v383, %v384
    %v386 = vrot.slane %v385, 2
    %v387 = vadd.f32 %v385, %v386
    %v388 = vrot.slane %v387, 1
    %v389 = vadd.f32 %v387, %v388
    %v390 = vsel %vm52, %v340, 0.0
    %v391 = vrot.slane %v390, 4
    %v392 = vadd.f32 %v390, %v391
    %v393 = vrot.slane %v392, 2
    %v394 = vadd.f32 %v392, %v393
    %v395 = vrot.slane %v394, 1
    %v396 = vadd.f32 %v394, %v395
    %v405 = vsel %vm223, %v354, %v347
    %v406 = vsel %vm225, %v361, %v405
    %v407 = vsel %vm227, %v368, %v406
    %v408 = vsel %vm229, %v375, %v407
    %v409 = vsel %vm231, %v382, %v408
    %v410 = vsel %vm233, %v389, %v409
    %v411 = vsel %vm235, %v396, %v410
    %v412 = vsel %vm52, %v411, 0
    %v414 = vsel %vm56, %v121, 0
    %416 = vmatpush.msra.mxu0 0.0
    %417 = vmatpush.msra.mxu0 0.0
    %418 = vmatpush.msra.mxu0 0.0
    %419 = vmatpush.msra.mxu0 0.0
    %420 = vmatpush.msra.mxu0 0.0
    %421 = vmatpush.msra.mxu0 0.0
    %422 = vmatpush.msra.mxu0 0.0
    %423 = vmatpush.msra.mxu0 0.0
    %424 = vmatpush.msra.mxu0 0.0
    %425 = vmatpush.msra.mxu0 0.0
    %426 = vmatpush.msra.mxu0 0.0
    %427 = vmatpush.msra.mxu0 0.0
    %428 = vmatpush.msra.mxu0 0.0
    %429 = vmatpush.msra.mxu0 0.0
    %430 = vmatpush.msra.mxu0 0.0
    %431 = vmatpush.msra.mxu0 %v414
    %432 = vmatmul.f32.gmra.mxu0 %v412
    %v433 = vpop.f32.mrf.mxu0
    %v434 = vadd.f32 0.0, %v433
    %435 = vdwg.mxu0
    %436 = vrot.lane.b32.xlu0 %v109, 112
    %v437 = vpop.permute.xlu0 %436
    %v440 = vsel %vm122, %v276, 0
    %442 = vmatpush.msra.mxu0 0.0
    %443 = vmatpush.msra.mxu0 0.0
    %444 = vmatpush.msra.mxu0 0.0
    %445 = vmatpush.msra.mxu0 0.0
    %446 = vmatpush.msra.mxu0 0.0
    %447 = vmatpush.msra.mxu0 0.0
    %448 = vmatpush.msra.mxu0 0.0
    %449 = vmatpush.msra.mxu0 0.0
    %450 = vmatpush.msra.mxu0 0.0
    %451 = vmatpush.msra.mxu0 0.0
    %452 = vmatpush.msra.mxu0 0.0
    %453 = vmatpush.msra.mxu0 0.0
    %454 = vmatpush.msra.mxu0 0.0
    %455 = vmatpush.msra.mxu0 0.0
    %456 = vmatpush.msra.mxu0 0.0
    %457 = vmatpush.msra.mxu0 %v437
    %458 = vmatmul.f32.gmra.mxu0 %v440
    %v459 = vpop.f32.mrf.mxu0
    %v460 = vadd.f32 %v434, %v459
    %461 = vdwg.mxu0
    %462 = vst.msk [vmem:[#allocation2] sm:$0xff] %vm122, %v460
    %v463 = vld [vmem:[%s8] sm:$0xf]
    %464 = vrot.lane.b32.xlu0 %v78, 120
    %v465 = vpop.permute.xlu0 %464
    %467 = vrot.lane.b32.xlu0 %v463, 120
    %v468 = vpop.permute.xlu0 %467
    %v469 = vsel %vm122, %v465, 0
    %v471 = vsel %vm122, %v468, 0
    %473 = vmatpush.xpose.msra.mxu0 0.0
    %474 = vmatpush.xpose.msra.mxu0 0.0
    %475 = vmatpush.xpose.msra.mxu0 0.0
    %476 = vmatpush.xpose.msra.mxu0 0.0
    %477 = vmatpush.xpose.msra.mxu0 0.0
    %478 = vmatpush.xpose.msra.mxu0 0.0
    %479 = vmatpush.xpose.msra.mxu0 0.0
    %480 = vmatpush.xpose.msra.mxu0 0.0
    %481 = vmatpush.xpose.msra.mxu0 0.0
    %482 = vmatpush.xpose.msra.mxu0 0.0
    %483 = vmatpush.xpose.msra.mxu0 0.0
    %484 = vmatpush.xpose.msra.mxu0 0.0
    %485 = vmatpush.xpose.msra.mxu0 0.0
    %486 = vmatpush.xpose.msra.mxu0 0.0
    %487 = vmatpush.xpose.msra.mxu0 0.0
    %488 = vmatpush.xpose.msra.mxu0 %v471
    %489 = vmatmul.f32.gmra.mxu0 %v469
    %v490 = vpop.f32.mrf.mxu0
    %v491 = vadd.f32 0.0, %v490
    %492 = vdwg.mxu0
    %v494 = vrot.slane %v491, 1
    %v495 = vrot.slane %v491, 2
    %v496 = vrot.slane %v491, 3
    %v497 = vrot.slane %v491, 4
    %v498 = vrot.slane %v491, 5
    %v499 = vrot.slane %v491, 6
    %v500 = vrot.slane %v491, 7
    %v501 = vperm.slane %v491, 0
    %v502 = vperm.slane %v494, 0
    %v503 = vperm.slane %v495, 0
    %v504 = vperm.slane %v496, 0
    %v505 = vperm.slane %v497, 0
    %v506 = vperm.slane %v498, 0
    %v507 = vperm.slane %v499, 0
    %v508 = vperm.slane %v500, 0
    %v517 = vmul.f32 %v111, %v501
    %v518 = vmul.f32 %v112, %v502
    %v519 = vmul.f32 %v113, %v503
    %v520 = vmul.f32 %v114, %v504
    %v521 = vmul.f32 %v115, %v505
    %v522 = vmul.f32 %v116, %v506
    %v523 = vmul.f32 %v117, %v507
    %v524 = vmul.f32 %v118, %v508
    %v525 = vsel %vm52, %v517, 0.0
    %526 = vadd.xlane.f32.xlu0 %v525
    %v527 = vpop.xlane.xlu0 %526
    %v528 = vsel %vm52, %v518, 0.0
    %529 = vadd.xlane.f32.xlu0 %v528
    %v530 = vpop.xlane.xlu0 %529
    %v531 = vsel %vm52, %v519, 0.0
    %532 = vadd.xlane.f32.xlu0 %v531
    %v533 = vpop.xlane.xlu0 %532
    %v534 = vsel %vm52, %v520, 0.0
    %535 = vadd.xlane.f32.xlu0 %v534
    %v536 = vpop.xlane.xlu0 %535
    %v537 = vsel %vm52, %v521, 0.0
    %538 = vadd.xlane.f32.xlu0 %v537
    %v539 = vpop.xlane.xlu0 %538
    %v540 = vsel %vm52, %v522, 0.0
    %541 = vadd.xlane.f32.xlu0 %v540
    %v542 = vpop.xlane.xlu0 %541
    %v543 = vsel %vm52, %v523, 0.0
    %544 = vadd.xlane.f32.xlu0 %v543
    %v545 = vpop.xlane.xlu0 %544
    %v546 = vsel %vm52, %v524, 0.0
    %547 = vadd.xlane.f32.xlu0 %v546
    %v548 = vpop.xlane.xlu0 %547
    %549 = vrot.lane.b32.xlu0 %v109, 120
    %v550 = vpop.permute.xlu0 %549
    %v559 = vperm.slane %v527, %v214
    %v560 = vperm.slane %v530, %v214
    %v561 = vperm.slane %v533, %v214
    %v562 = vperm.slane %v536, %v214
    %v563 = vperm.slane %v539, %v214
    %v564 = vperm.slane %v542, %v214
    %v565 = vperm.slane %v545, %v214
    %v566 = vperm.slane %v548, %v214
    %v567 = vsel %vm223, %v560, %v559
    %v568 = vsel %vm225, %v561, %v567
    %v569 = vsel %vm227, %v562, %v568
    %v570 = vsel %vm229, %v563, %v569
    %v571 = vsel %vm231, %v564, %v570
    %v572 = vsel %vm233, %v565, %v571
    %v573 = vsel %vm235, %v566, %v572
    %v575 = vsel %vm122, %v550, 0
    %577 = vmatpush.xpose.msra.mxu0 0.0
    %578 = vmatpush.xpose.msra.mxu0 0.0
    %579 = vmatpush.xpose.msra.mxu0 0.0
    %580 = vmatpush.xpose.msra.mxu0 0.0
    %581 = vmatpush.xpose.msra.mxu0 0.0
    %582 = vmatpush.xpose.msra.mxu0 0.0
    %583 = vmatpush.xpose.msra.mxu0 0.0
    %584 = vmatpush.xpose.msra.mxu0 0.0
    %585 = vmatpush.xpose.msra.mxu0 0.0
    %586 = vmatpush.xpose.msra.mxu0 0.0
    %587 = vmatpush.xpose.msra.mxu0 0.0
    %588 = vmatpush.xpose.msra.mxu0 0.0
    %589 = vmatpush.xpose.msra.mxu0 0.0
    %590 = vmatpush.xpose.msra.mxu0 0.0
    %591 = vmatpush.xpose.msra.mxu0 0.0
    %592 = vmatpush.xpose.msra.mxu0 %v575
    %593 = vmatmul.f32.gmra.mxu0 %v469
    %v594 = vpop.f32.mrf.mxu0
    %v595 = vadd.f32 %v573, %v594
    %596 = vdwg.mxu0
    %v597 = vmul.f32 %v595, 0.35355338
    %v598 = vsel %vm120, %v597, -1e+30
    %v599 = vsel %vm122, %v598, -inf
    %600 = vmax.xlane.f32.xlu0 %v599
    %v601 = vpop.xlane.xlu0 %600
    %v602 = vsub.f32 %v598, %v601
    %v603 = vmul.f32 %v602, 1.442695
    %v604 = vpow.pop %v603
    %v605 = vsel %vm120, %v604, 0.0
    %v606 = vsel %vm122, %v605, 0.0
    %607 = vadd.xlane.f32.xlu0 %v606
    %v608 = vpop.xlane.xlu0 %607
    %vm609 = vcmp.gt.f32.partialorder %v608, 0.0
    %v610 = vsel %vm609, %v608, 1.0
    %v611 = vrcp.pop %v610
    %v612 = vmul.f32 %v605, %v611
    %v613 = vperm.slane %v612, 0
    %v614 = vlaneseq
    %v615 = vshrl.u32 %v614, 7
    %617 = vset.pattern.permute.xlu0 %v615
    %618 = vperm.xlu0 %617, %v613
    %v619 = vpop.permute.xlu0 %618
    %v620 = vperm.slane %v612, 1
    %v621 = vlaneseq
    %v622 = vshrl.u32 %v621, 7
    %624 = vset.pattern.permute.xlu0 %v622
    %625 = vperm.xlu0 %624, %v620
    %v626 = vpop.permute.xlu0 %625
    %v627 = vperm.slane %v612, 2
    %v628 = vlaneseq
    %v629 = vshrl.u32 %v628, 7
    %631 = vset.pattern.permute.xlu0 %v629
    %632 = vperm.xlu0 %631, %v627
    %v633 = vpop.permute.xlu0 %632
    %v634 = vperm.slane %v612, 3
    %v635 = vlaneseq
    %v636 = vshrl.u32 %v635, 7
    %638 = vset.pattern.permute.xlu0 %v636
    %639 = vperm.xlu0 %638, %v634
    %v640 = vpop.permute.xlu0 %639
    %v641 = vperm.slane %v612, 4
    %v642 = vlaneseq
    %v643 = vshrl.u32 %v642, 7
    %645 = vset.pattern.permute.xlu0 %v643
    %646 = vperm.xlu0 %645, %v641
    %v647 = vpop.permute.xlu0 %646
    %v648 = vperm.slane %v612, 5
    %v649 = vlaneseq
    %v650 = vshrl.u32 %v649, 7
    %652 = vset.pattern.permute.xlu0 %v650
    %653 = vperm.xlu0 %652, %v648
    %v654 = vpop.permute.xlu0 %653
    %v655 = vperm.slane %v612, 6
    %v656 = vlaneseq
    %v657 = vshrl.u32 %v656, 7
    %659 = vset.pattern.permute.xlu0 %v657
    %660 = vperm.xlu0 %659, %v655
    %v661 = vpop.permute.xlu0 %660
    %v662 = vperm.slane %v612, 7
    %v663 = vlaneseq
    %v664 = vshrl.u32 %v663, 7
    %666 = vset.pattern.permute.xlu0 %v664
    %667 = vperm.xlu0 %666, %v662
    %v668 = vpop.permute.xlu0 %667
    %v669 = vmul.f32 %v619, %v111
    %v670 = vmul.f32 %v626, %v112
    %v671 = vmul.f32 %v633, %v113
    %v672 = vmul.f32 %v640, %v114
    %v673 = vmul.f32 %v647, %v115
    %v674 = vmul.f32 %v654, %v116
    %v675 = vmul.f32 %v661, %v117
    %v676 = vmul.f32 %v668, %v118
    %v677 = vsel %vm52, %v669, 0.0
    %v678 = vrot.slane %v677, 4
    %v679 = vadd.f32 %v677, %v678
    %v680 = vrot.slane %v679, 2
    %v681 = vadd.f32 %v679, %v680
    %v682 = vrot.slane %v681, 1
    %v683 = vadd.f32 %v681, %v682
    %v684 = vsel %vm52, %v670, 0.0
    %v685 = vrot.slane %v684, 4
    %v686 = vadd.f32 %v684, %v685
    %v687 = vrot.slane %v686, 2
    %v688 = vadd.f32 %v686, %v687
    %v689 = vrot.slane %v688, 1
    %v690 = vadd.f32 %v688, %v689
    %v691 = vsel %vm52, %v671, 0.0
    %v692 = vrot.slane %v691, 4
    %v693 = vadd.f32 %v691, %v692
    %v694 = vrot.slane %v693, 2
    %v695 = vadd.f32 %v693, %v694
    %v696 = vrot.slane %v695, 1
    %v697 = vadd.f32 %v695, %v696
    %v698 = vsel %vm52, %v672, 0.0
    %v699 = vrot.slane %v698, 4
    %v700 = vadd.f32 %v698, %v699
    %v701 = vrot.slane %v700, 2
    %v702 = vadd.f32 %v700, %v701
    %v703 = vrot.slane %v702, 1
    %v704 = vadd.f32 %v702, %v703
    %v705 = vsel %vm52, %v673, 0.0
    %v706 = vrot.slane %v705, 4
    %v707 = vadd.f32 %v705, %v706
    %v708 = vrot.slane %v707, 2
    %v709 = vadd.f32 %v707, %v708
    %v710 = vrot.slane %v709, 1
    %v711 = vadd.f32 %v709, %v710
    %v712 = vsel %vm52, %v674, 0.0
    %v713 = vrot.slane %v712, 4
    %v714 = vadd.f32 %v712, %v713
    %v715 = vrot.slane %v714, 2
    %v716 = vadd.f32 %v714, %v715
    %v717 = vrot.slane %v716, 1
    %v718 = vadd.f32 %v716, %v717
    %v719 = vsel %vm52, %v675, 0.0
    %v720 = vrot.slane %v719, 4
    %v721 = vadd.f32 %v719, %v720
    %v722 = vrot.slane %v721, 2
    %v723 = vadd.f32 %v721, %v722
    %v724 = vrot.slane %v723, 1
    %v725 = vadd.f32 %v723, %v724
    %v726 = vsel %vm52, %v676, 0.0
    %v727 = vrot.slane %v726, 4
    %v728 = vadd.f32 %v726, %v727
    %v729 = vrot.slane %v728, 2
    %v730 = vadd.f32 %v728, %v729
    %v731 = vrot.slane %v730, 1
    %v732 = vadd.f32 %v730, %v731
    %v741 = vsel %vm223, %v690, %v683
    %v742 = vsel %vm225, %v697, %v741
    %v743 = vsel %vm227, %v704, %v742
    %v744 = vsel %vm229, %v711, %v743
    %v745 = vsel %vm231, %v718, %v744
    %v746 = vsel %vm233, %v725, %v745
    %v747 = vsel %vm235, %v732, %v746
    %v748 = vsel %vm52, %v747, 0
    %v750 = vsel %vm56, %v468, 0
    %752 = vmatpush.msra.mxu0 0.0
    %753 = vmatpush.msra.mxu0 0.0
    %754 = vmatpush.msra.mxu0 0.0
    %755 = vmatpush.msra.mxu0 0.0
    %756 = vmatpush.msra.mxu0 0.0
    %757 = vmatpush.msra.mxu0 0.0
    %758 = vmatpush.msra.mxu0 0.0
    %759 = vmatpush.msra.mxu0 0.0
    %760 = vmatpush.msra.mxu0 0.0
    %761 = vmatpush.msra.mxu0 0.0
    %762 = vmatpush.msra.mxu0 0.0
    %763 = vmatpush.msra.mxu0 0.0
    %764 = vmatpush.msra.mxu0 0.0
    %765 = vmatpush.msra.mxu0 0.0
    %766 = vmatpush.msra.mxu0 0.0
    %767 = vmatpush.msra.mxu0 %v750
    %768 = vmatmul.f32.gmra.mxu0 %v748
    %v769 = vpop.f32.mrf.mxu0
    %v770 = vadd.f32 0.0, %v769
    %771 = vdwg.mxu0
    %772 = vrot.lane.b32.xlu0 %v109, 104
    %v773 = vpop.permute.xlu0 %772
    %v776 = vsel %vm122, %v612, 0
    %778 = vmatpush.msra.mxu0 0.0
    %779 = vmatpush.msra.mxu0 0.0
    %780 = vmatpush.msra.mxu0 0.0
    %781 = vmatpush.msra.mxu0 0.0
    %782 = vmatpush.msra.mxu0 0.0
    %783 = vmatpush.msra.mxu0 0.0
    %784 = vmatpush.msra.mxu0 0.0
    %785 = vmatpush.msra.mxu0 0.0
    %786 = vmatpush.msra.mxu0 0.0
    %787 = vmatpush.msra.mxu0 0.0
    %788 = vmatpush.msra.mxu0 0.0
    %789 = vmatpush.msra.mxu0 0.0
    %790 = vmatpush.msra.mxu0 0.0
    %791 = vmatpush.msra.mxu0 0.0
    %792 = vmatpush.msra.mxu0 0.0
    %793 = vmatpush.msra.mxu0 %v773
    %794 = vmatmul.f32.gmra.mxu0 %v776
    %v795 = vpop.f32.mrf.mxu0
    %v796 = vadd.f32 %v770, %v795
    %797 = vdwg.mxu0
    %799 = vrot.lane.b32.xlu0 %v796, 8
    %v800 = vpop.permute.xlu0 %799
    %vm802 = vcmask 130112
    %803 = vst.msk [vmem:[#allocation2] sm:$0xff] %vm802, %v800
    %v804 = vld [vmem:[#allocation2] sm:$0xff]
    %805 = vrot.lane.b32.xlu0 %v78, 112
    %v806 = vpop.permute.xlu0 %805
    %v808 = vadd.f32 %v804, %v806
    %v809 = vld [vmem:[%s12] sm:$0x1]
    %v810 = vadd.f32 %v809, 1e-05
    %v811 = vrsqrt.pop %v810
    %v812 = vmul.f32 %v811, %v810
    %v813 = vmul.f32 %v812, %v811
    %v814 = vmul.f32 0.5, %v813
    %v815 = vsub.f32 1.5, %v814
    %v816 = vmul.f32 %v811, %v815
    %vm817 = vweird.f32 %v810
    %vm818 = vweird.f32 %v811
    %vm819 = vmor %vm817, %vm818
    %v820 = vsel %vm819, %v811, %v816
    %v821 = vld [vmem:[%s11] sm:$0x1]
    %v823 = vperm.slane %v821, 0
    %v825 = vsub.f32 %v808, %v823
    %v827 = vperm.slane %v820, 0
    %v829 = vmul.f32 %v825, %v827
    %v830 = vld [vmem:[%s9] sm:$0x1]
    %v832 = vperm.slane %v830, 0
    %v834 = vmul.f32 %v829, %v832
    %v835 = vld [vmem:[%s10] sm:$0x1]
    %v837 = vperm.slane %v835, 0
    %v839 = vadd.f32 %v834, %v837
    %v840 = vmax.f32 %v839, 0.0
    %vm841 = vcmask 130048
    %842 = vst.msk [vmem:[#allocation3] sm:$0xff] %vm841, %v840
    // Predicated region
    $region54: #{tpu_custom_call.1} parent=1 // pred_check
      _
    $region55: #{tpu_custom_call.1} parent=1 // pred_check_branch
      %844 = sbr.rel (0) target = $region57
    $region56: #{tpu_custom_call.1} parent=1 // pred_region
      %846 = vsyncadd [#allocation4], 0
      %s848 = sshll.u32 [#allocation3], 4
      %s849 = int_to_ptr.vmem [resolvable:$true] %s848
      %s850 = sshll.u32 %s13, 4
      %s851 = int_to_ptr.hbm [resolvable:$true] %s850
      %853 = dma.vmem_to_hbm [thread:$0]  %s849, 128, %s851, [#allocation4]
    $region57: #{tpu_custom_call.1} parent=1 // pred_fallthru
      _
    // Predicated region
    $region58: #{tpu_custom_call.1} parent=1 // pred_check
      _
    $region59: #{tpu_custom_call.1} parent=1 // pred_check_branch
      %855 = sbr.rel (0) target = $region61
    $region60: #{tpu_custom_call.1} parent=1 // pred_region
      %857 = dma.done [#allocation4], 128
    $region61: #{tpu_custom_call.1} parent=1 // pred_fallthru
      _
    %858 = vsyncpa [#allocation4], 1

</llo_original>
